<compile_context>
chip_gen: v5e
topology: v5e:2x2
jax: 0.10.0
libtpu: 0.0.40
codegen_flags: <defaults>
</compile_context>

<pallas_src>
import math

import jax
import jax.numpy as jnp
from jax.experimental import pallas as pl
from jax.experimental.pallas import tpu as pltpu

SUBLANE = 8
MAX_TILE_B = 512


def _round_up(n, m):
    return ((n + m - 1) // m) * m


def _choose_tile_b(B):
    """Batch tile: multiple of 8, <= 512 rows, >= 2 grid steps when feasible."""
    if B <= SUBLANE:
        return B  # single block == full array dim (legal for any B)
    n_tiles = max(2, pl.cdiv(B, MAX_TILE_B))  # >=2 steps -> v7x megacore sharding
    return min(MAX_TILE_B, _round_up(pl.cdiv(B, n_tiles), SUBLANE))


# ----------------------------- Pallas kernels ------------------------------ #

def _gelu_f32(x):
    # GELU, tanh approximation (matches torch.nn.GELU(approximate='tanh'))
    c = jnp.float32(0.7978845608028654)  # sqrt(2/pi)
    return 0.5 * x * (1.0 + jnp.tanh(c * (x + 0.044715 * x * x * x)))


def _fused_mlp_kernel(f_ref, x_ref, w1_ref, b1_ref, w2_ref, b2_ref, o_ref):
    # y = (gelu(x @ W1 + b1) * factor) @ W2 + b2   -- one fused kernel,
    # f32 accumulation and f32 elementwise epilogue (v5e-safe).
    w1 = w1_ref[...]
    h = jnp.dot(x_ref[...].astype(w1.dtype), w1,
                preferred_element_type=jnp.float32)
    h = h + b1_ref[...].astype(jnp.float32)
    h = _gelu_f32(h)
    h = h * f_ref[0]                               # runtime scalar (SMEM, f32)
    w2 = w2_ref[...]
    y = jnp.dot(h.astype(w2.dtype), w2, preferred_element_type=jnp.float32)
    o_ref[...] = (y + b2_ref[...].astype(jnp.float32)).astype(o_ref.dtype)


def _linear_kernel(x_ref, w_ref, b_ref, o_ref):
    # Fallback (unfused) path: y = x @ W + b
    w = w_ref[...]
    y = jnp.dot(x_ref[...].astype(w.dtype), w, preferred_element_type=jnp.float32)
    o_ref[...] = (y + b_ref[...].astype(jnp.float32)).astype(o_ref.dtype)


def _gelu_kernel(x_ref, o_ref):
    o_ref[...] = _gelu_f32(x_ref[...].astype(jnp.float32)).astype(o_ref.dtype)


def _scale_kernel(f_ref, x_ref, o_ref):
    # elementwise multiply by a runtime f32 scalar held in SMEM
    o_ref[...] = (x_ref[...].astype(jnp.float32) * f_ref[0]).astype(o_ref.dtype)


# --------------------------- fused jitted wrapper --------------------------- #

@jax.jit
def _fused_mlp(x, w1, b1, w2, b2, factor):
    B, d_in = x.shape
    hid = w1.shape[1]
    d_out = w2.shape[1]

    tile_b = _choose_tile_b(B)
    grid = (pl.cdiv(B, tile_b),)          # ragged last tile handled by Pallas
    f = jnp.asarray(factor, dtype=jnp.float32).reshape((1,))

    return pl.pallas_call(
        _fused_mlp_kernel,
        out_shape=jax.ShapeDtypeStruct((B, d_out), x.dtype),
        grid=grid,
        in_specs=[
            pl.BlockSpec(memory_space=pltpu.MemorySpace.SMEM),   # factor
            pl.BlockSpec((tile_b, d_in), lambda i: (i, 0)),      # x tile
            pl.BlockSpec((d_in, hid), lambda i: (0, 0)),         # W1 (resident)
            pl.BlockSpec((1, hid), lambda i: (0, 0)),            # b1 (resident)
            pl.BlockSpec((hid, d_out), lambda i: (0, 0)),        # W2 (resident)
            pl.BlockSpec((1, d_out), lambda i: (0, 0)),          # b2 (resident)
        ],
        out_specs=pl.BlockSpec((tile_b, d_out), lambda i: (i, 0)),
        compiler_params=pltpu.CompilerParams(
            dimension_semantics=("parallel",),
        ),
    )(f, x, w1, b1, w2, b2)


# ------------------------------ module wrappers ----------------------------- #

class Linear:
    def __init__(self, key, d_in, d_out, dtype=jnp.float32,
                 matmul_dtype=jnp.float32):
        kw, kb = jax.random.split(key)
        bound = 1.0 / math.sqrt(d_in)
        self.d_in, self.d_out = d_in, d_out
        self.w = jax.random.uniform(kw, (d_in, d_out), dtype, -bound, bound)
        self.b = jax.random.uniform(kb, (1, d_out), dtype, -bound, bound)
        # Optional reduced-precision matmul operands (bf16 on v6e/v7x); the
        # bias / epilogue stay f32.  Default f32 == exact reference numerics.
        self.w_mm = self.w.astype(matmul_dtype)

    def __call__(self, x):
        B, d_in = x.shape
        d_out = self.d_out
        tile_b = _choose_tile_b(B)
        grid = (pl.cdiv(B, tile_b),)
        return pl.pallas_call(
            _linear_kernel,
            out_shape=jax.ShapeDtypeStruct((B, d_out), x.dtype),
            grid=grid,
            in_specs=[
                pl.BlockSpec((tile_b, d_in), lambda i: (i, 0)),
                pl.BlockSpec((d_in, d_out), lambda i: (0, 0)),
                pl.BlockSpec((1, d_out), lambda i: (0, 0)),
            ],
            out_specs=pl.BlockSpec((tile_b, d_out), lambda i: (i, 0)),
            compiler_params=pltpu.CompilerParams(
                dimension_semantics=("parallel",)),
        )(x, self.w_mm, self.b)


class GELU:
    def __call__(self, x):
        B, D = x.shape
        tile_b = _choose_tile_b(B)
        grid = (pl.cdiv(B, tile_b),)
        return pl.pallas_call(
            _gelu_kernel,
            out_shape=jax.ShapeDtypeStruct(x.shape, x.dtype),
            grid=grid,
            in_specs=[pl.BlockSpec((tile_b, D), lambda i: (i, 0))],
            out_specs=pl.BlockSpec((tile_b, D), lambda i: (i, 0)),
            compiler_params=pltpu.CompilerParams(
                dimension_semantics=("parallel",)),
        )(x)


class Scale:
    def __call__(self, x, factor=1.0):
        B, D = x.shape
        tile_b = _choose_tile_b(B)
        grid = (pl.cdiv(B, tile_b),)
        f = jnp.asarray(factor, dtype=jnp.float32).reshape((1,))
        return pl.pallas_call(
            _scale_kernel,
            out_shape=jax.ShapeDtypeStruct(x.shape, x.dtype),
            grid=grid,
            in_specs=[
                pl.BlockSpec(memory_space=pltpu.MemorySpace.SMEM),
                pl.BlockSpec((tile_b, D), lambda i: (i, 0)),
            ],
            out_specs=pl.BlockSpec((tile_b, D), lambda i: (i, 0)),
            compiler_params=pltpu.CompilerParams(
                dimension_semantics=("parallel",)),
        )(f, x)


# ------------------------------ NamedSequential ----------------------------- #

class NamedSequential:
    """JAX/Pallas port of niarb.nn.modules.containers.NamedSequential.

    Applies named sub-modules in order, routing "<name>_kwargs" to each module.
    When the module sequence is exactly Linear -> GELU -> Scale -> Linear it
    dispatches a single fused Pallas kernel; otherwise it falls back to calling
    each module's own (batch-tiled) Pallas kernel in sequence.
    """

    def __init__(self, modules: dict):
        if len(modules) == 0:
            raise ValueError("`modules` must contain at least one module.")
        self._modules = dict(modules)
        self._allowed_keywords = {f"{name}_kwargs" for name in modules.keys()}

    def __call__(self, input, **kwargs):
        if any(k not in self._allowed_keywords for k in kwargs.keys()):
            raise ValueError(
                f"unexpected kwargs: {set(kwargs.keys()) - self._allowed_keywords}"
            )
        fused = self._try_fused(input, kwargs)
        if fused is not None:
            return fused
        for name, module in self._modules.items():
            input = module(input, **kwargs.get(f"{name}_kwargs", {}))
        return input

    def _try_fused(self, x, kwargs):
        mods = list(self._modules.items())
        if len(mods) != 4:
            return None
        (n1, m1), (n2, m2), (n3, m3), (n4, m4) = mods
        if not (isinstance(m1, Linear) and isinstance(m2, GELU)
                and isinstance(m3, Scale) and isinstance(m4, Linear)):
            return None
        # only the Scale module may receive kwargs, and only "factor"
        for name in (n1, n2, n4):
            if kwargs.get(f"{name}_kwargs"):
                return None
        scale_kw = dict(kwargs.get(f"{n3}_kwargs", {}))
        factor = scale_kw.pop("factor", 1.0)
        if scale_kw:
            return None
        if x.ndim != 2 or x.shape[1] != m1.d_in or m1.d_out != m4.d_in:
            return None
        return _fused_mlp(x, m1.w_mm, m1.b, m4.w_mm, m4.b, factor)

    def __getitem__(self, key):
        if isinstance(key, str):
            return self._modules[key]
        if isinstance(key, int):
            return list(self._modules.values())[key]
        if isinstance(key, slice):
            names = list(self._modules.keys())
            start = names.index(key.start) if isinstance(key.start, str) else key.start
            stop = names.index(key.stop) + 1 if isinstance(key.stop, str) else key.stop
            key = slice(start, stop, key.step)
            return NamedSequential(dict(list(self._modules.items())[key]))
        raise TypeError(
            f"key must be str, int, or slice, but type(key)={type(key)!r}."
        )


# ---------------------------------- main ------------------------------------ #

if __name__ == "__main__":
    key = jax.random.PRNGKey(0)
    k_x, k_l1, k_l2 = jax.random.split(key, 3)

    B, D_IN, HIDDEN, D_OUT = 8, 32, 64, 32

    model = NamedSequential(
        {
            "linear1": Linear(k_l1, D_IN, HIDDEN),
            "act": GELU(),
            "scale": Scale(),
            "linear2": Linear(k_l2, HIDDEN, D_OUT),
        }
    )

    x = jax.random.normal(k_x, (B, D_IN), dtype=jnp.float32)

    # fused path (single Pallas kernel, jitted)
    out = model(x, scale_kwargs={"factor": 2.0})
    out = jax.block_until_ready(out)

    # reference check in plain JAX
    def ref(x):
        l1 = model["linear1"]
        l2 = model["linear2"]
        h = x @ l1.w + l1.b
        c = 0.7978845608028654
        h = 0.5 * h * (1.0 + jnp.tanh(c * (h + 0.044715 * h**3)))
        h = h * 2.0
        return h @ l2.w + l2.b

    assert out.shape == (B, D_OUT)
    assert jnp.allclose(out, ref(x), atol=1e-4, rtol=1e-4)

    # also exercise the generic (unfused, batch-tiled) container path via slicing,
    # including a ragged batch (rows not a multiple of the tile)
    sub = model["act":"scale"]          # NamedSequential({"act", "scale"})
    y = jax.block_until_ready(sub(out, scale_kwargs={"factor": 0.5}))
    assert y.shape == out.shape
    h = 0.5 * out * (1.0 + jnp.tanh(0.7978845608028654 * (out + 0.044715 * out**3)))
    assert jnp.allclose(y, 0.5 * h, atol=1e-4, rtol=1e-4)

    x_ragged = jax.random.normal(k_x, (13, D_IN), dtype=jnp.float32)  # partial tile
    out_r = jax.block_until_ready(model(x_ragged, scale_kwargs={"factor": 2.0}))
    assert out_r.shape == (13, D_OUT)
    assert jnp.allclose(out_r, ref(x_ragged), atol=1e-4, rtol=1e-4)

    print("KERNEL_OK")
</pallas_src>

<mosaic_0001>
module attributes {stable_mosaic.version = 11 : i64} {
  func.func @_fused_mlp_kernel(%arg0: i32, %arg1: memref<1xf32, #tpu.memory_space<smem>>, %arg2: memref<8x32xf32, #tpu.memory_space<vmem>>, %arg3: memref<32x64xf32, #tpu.memory_space<vmem>>, %arg4: memref<1x64xf32, #tpu.memory_space<vmem>>, %arg5: memref<64x32xf32, #tpu.memory_space<vmem>>, %arg6: memref<1x32xf32, #tpu.memory_space<vmem>>, %arg7: memref<8x32xf32, #tpu.memory_space<vmem>>) attributes {dimension_semantics = [#tpu.dimension_semantics<parallel>], iteration_bounds = array<i64: 1>, scalar_prefetch = 0 : i64, scratch_operands = 0 : i64, tpu.core_type = #tpu.core_type<tc>, window_params = [{transform_indices = @transform_0, window_bounds = array<i64: 1>}, {transform_indices = @transform_1, window_bounds = array<i64: 8, 32>}, {pipeline_mode = #tpu.pipeline_mode<synchronous>, transform_indices = @transform_2, window_bounds = array<i64: 32, 64>}, {pipeline_mode = #tpu.pipeline_mode<synchronous>, transform_indices = @transform_3, window_bounds = array<i64: 1, 64>}, {pipeline_mode = #tpu.pipeline_mode<synchronous>, transform_indices = @transform_4, window_bounds = array<i64: 64, 32>}, {pipeline_mode = #tpu.pipeline_mode<synchronous>, transform_indices = @transform_5, window_bounds = array<i64: 1, 32>}, {transform_indices = @transform_6, window_bounds = array<i64: 8, 32>}]} {
    %c0 = arith.constant 0 : index
    %c0_0 = arith.constant 0 : index
    %0 = vector.load %arg3[%c0, %c0_0] : memref<32x64xf32, #tpu.memory_space<vmem>>, vector<32x64xf32>
    %c0_1 = arith.constant 0 : index
    %c0_2 = arith.constant 0 : index
    %1 = vector.load %arg2[%c0_1, %c0_2] : memref<8x32xf32, #tpu.memory_space<vmem>>, vector<8x32xf32>
    %cst = arith.constant dense<0.000000e+00> : vector<8x64xf32>
    %2 = tpu.matmul %1, %0, %cst {dimension_numbers = #tpu.dot_dimension_numbers<[1], [0], [0], [1], [0, 0, 1, 1], [], []>} : vector<8x32xf32>, vector<32x64xf32>, vector<8x64xf32> -> vector<8x64xf32>
    %c0_3 = arith.constant 0 : index
    %c0_4 = arith.constant 0 : index
    %3 = vector.load %arg4[%c0_3, %c0_4] : memref<1x64xf32, #tpu.memory_space<vmem>>, vector<1x64xf32>
    %4 = vector.broadcast %3 : vector<1x64xf32> to vector<8x64xf32>
    %5 = arith.addf %2, %4 : vector<8x64xf32>
    %cst_5 = arith.constant 5.000000e-01 : f32
    %6 = vector.broadcast %cst_5 : f32 to vector<8x64xf32>
    %7 = arith.mulf %6, %5 : vector<8x64xf32>
    %cst_6 = arith.constant 4.471500e-02 : f32
    %8 = vector.broadcast %cst_6 : f32 to vector<8x64xf32>
    %9 = arith.mulf %8, %5 : vector<8x64xf32>
    %10 = arith.mulf %9, %5 : vector<8x64xf32>
    %11 = arith.mulf %10, %5 : vector<8x64xf32>
    %12 = arith.addf %5, %11 : vector<8x64xf32>
    %cst_7 = arith.constant 0.797884583 : f32
    %13 = vector.broadcast %cst_7 : f32 to vector<8x64xf32>
    %14 = arith.mulf %13, %12 : vector<8x64xf32>
    %15 = math.tanh %14 : vector<8x64xf32>
    %cst_8 = arith.constant 1.000000e+00 : f32
    %16 = vector.broadcast %cst_8 : f32 to vector<8x64xf32>
    %17 = arith.addf %16, %15 : vector<8x64xf32>
    %18 = arith.mulf %7, %17 : vector<8x64xf32>
    %c0_9 = arith.constant 0 : index
    %19 = memref.load %arg1[%c0_9] : memref<1xf32, #tpu.memory_space<smem>>
    %20 = vector.broadcast %19 : f32 to vector<8x64xf32>
    %21 = arith.mulf %18, %20 : vector<8x64xf32>
    %c0_10 = arith.constant 0 : index
    %c0_11 = arith.constant 0 : index
    %22 = vector.load %arg5[%c0_10, %c0_11] : memref<64x32xf32, #tpu.memory_space<vmem>>, vector<64x32xf32>
    %cst_12 = arith.constant dense<0.000000e+00> : vector<8x32xf32>
    %23 = tpu.matmul %21, %22, %cst_12 {dimension_numbers = #tpu.dot_dimension_numbers<[1], [0], [0], [1], [0, 0, 1, 1], [], []>} : vector<8x64xf32>, vector<64x32xf32>, vector<8x32xf32> -> vector<8x32xf32>
    %c0_13 = arith.constant 0 : index
    %c0_14 = arith.constant 0 : index
    %24 = vector.load %arg6[%c0_13, %c0_14] : memref<1x32xf32, #tpu.memory_space<vmem>>, vector<1x32xf32>
    %25 = vector.broadcast %24 : vector<1x32xf32> to vector<8x32xf32>
    %26 = arith.addf %23, %25 : vector<8x32xf32>
    %c0_15 = arith.constant 0 : index
    %c0_16 = arith.constant 0 : index
    %27 = vector.load %arg7[%c0_15, %c0_16] : memref<8x32xf32, #tpu.memory_space<vmem>>, vector<8x32xf32>
    tpu.vector_store %arg7[%c0_15, %c0_16], %26 {strides = array<i32>} : memref<8x32xf32, #tpu.memory_space<vmem>>, vector<8x32xf32>,
    return
  }
  func.func @transform_0(%arg0: i32) -> i32 {
    %c0_i32 = arith.constant 0 : i32
    %c0_i32_0 = arith.constant 0 : i32
    return %c0_i32 : i32
  }
  func.func @transform_1(%arg0: i32) -> (i32, i32) {
    %c0_i32 = arith.constant 0 : i32
    %c0_i32_0 = arith.constant 0 : i32
    return %arg0, %c0_i32 : i32, i32
  }
  func.func @transform_2(%arg0: i32) -> (i32, i32) {
    %c0_i32 = arith.constant 0 : i32
    %c0_i32_0 = arith.constant 0 : i32
    %c0_i32_1 = arith.constant 0 : i32
    return %c0_i32, %c0_i32_0 : i32, i32
  }
  func.func @transform_3(%arg0: i32) -> (i32, i32) {
    %c0_i32 = arith.constant 0 : i32
    %c0_i32_0 = arith.constant 0 : i32
    %c0_i32_1 = arith.constant 0 : i32
    return %c0_i32, %c0_i32_0 : i32, i32
  }
  func.func @transform_4(%arg0: i32) -> (i32, i32) {
    %c0_i32 = arith.constant 0 : i32
    %c0_i32_0 = arith.constant 0 : i32
    %c0_i32_1 = arith.constant 0 : i32
    return %c0_i32, %c0_i32_0 : i32, i32
  }
  func.func @transform_5(%arg0: i32) -> (i32, i32) {
    %c0_i32 = arith.constant 0 : i32
    %c0_i32_0 = arith.constant 0 : i32
    %c0_i32_1 = arith.constant 0 : i32
    return %c0_i32, %c0_i32_0 : i32, i32
  }
  func.func @transform_6(%arg0: i32) -> (i32, i32) {
    %c0_i32 = arith.constant 0 : i32
    %c0_i32_0 = arith.constant 0 : i32
    return %arg0, %c0_i32 : i32, i32
  }
}

</mosaic_0001>

<llo_original>
// kernel: _fused_mlp.1
$region0: #{_fused_mlp.1}
  #allocation0 [shape = 'u32[]', space=smem, size = 0x4, offset = 0x4, fixed_abs, tag = 'smem constant byte address 0x4 - core index']
  #allocation1 [shape = 'u32[72,128]{1,0:T(1,128)}', space=vmem, size = 0x9000, scoped, tag = 'internal scratch']
  #allocation2 [shape = 'f32[1]{0:T(128)S(6)}', space=smem, size = 0x200, scoped, tag = 'scoped memory for _fused_mlp.1']
  %s0 = inlined_call_operand.<no memory space> [shape: f32[1], index: 0, kind: input, shape index: {}]
  %s1 = inlined_call_operand.vmem [shape: f32[8,32], index: 1, kind: input, shape index: {}]
  %s2 = inlined_call_operand.vmem [shape: f32[32,64], index: 2, kind: input, shape index: {}]
  %s3 = inlined_call_operand.vmem [shape: f32[1,64], index: 3, kind: input, shape index: {}]
  %s4 = inlined_call_operand.vmem [shape: f32[64,32], index: 4, kind: input, shape index: {}]
  %s5 = inlined_call_operand.vmem [shape: f32[1,32], index: 5, kind: input, shape index: {}]
  %s6 = inlined_call_operand.hbm [shape: f32[8,32], index: 6, kind: output, shape index: {}]
  %s7 = sld [smem:[#allocation0]]
  $region34: #{_fused_mlp.1} parent=0
    _
  %s9 = ssub.s32 1, %s7
  %s10 = scalar_select 0, %s9, %s7
  %11 = sst [smem:[#allocation2]] %s0
  $region1: #{_fused_mlp.1} parent=0
    #allocation3 [shape = 'u8[4096]{0}', space=vmem, size = 0x1000, scoped, tag = 'output window, operand 0, single buffered']
    #allocation4 [shape = 's32[1]{0}', space=sflag, size = 0x4, scoped, tag = 'scoped memory for _fused_mlp.1']
    %12 = vsyncpa [#allocation4], 0
    // Predicated region
    $region2: #{_fused_mlp.1} parent=1 // pred_check
      _
    $region3: #{_fused_mlp.1} parent=1 // pred_check_branch
      %14 = sbr.rel (0) target = $region5
    $region4: #{_fused_mlp.1} parent=1 // pred_region
      _
    $region5: #{_fused_mlp.1} parent=1 // pred_fallthru
      _
    // Predicated region
    $region6: #{_fused_mlp.1} parent=1 // pred_check
      _
    $region7: #{_fused_mlp.1} parent=1 // pred_check_branch
      %16 = sbr.rel (0) target = $region9
    $region8: #{_fused_mlp.1} parent=1 // pred_region
      _
    $region9: #{_fused_mlp.1} parent=1 // pred_fallthru
      _
    // Predicated region
    $region10: #{_fused_mlp.1} parent=1 // pred_check
      _
    $region11: #{_fused_mlp.1} parent=1 // pred_check_branch
      %18 = sbr.rel (0) target = $region13
    $region12: #{_fused_mlp.1} parent=1 // pred_region
      _
    $region13: #{_fused_mlp.1} parent=1 // pred_fallthru
      _
    // Predicated region
    $region14: #{_fused_mlp.1} parent=1 // pred_check
      _
    $region15: #{_fused_mlp.1} parent=1 // pred_check_branch
      %20 = sbr.rel (0) target = $region17
    $region16: #{_fused_mlp.1} parent=1 // pred_region
      _
    $region17: #{_fused_mlp.1} parent=1 // pred_fallthru
      _
    // Predicated region
    $region18: #{_fused_mlp.1} parent=1 // pred_check
      _
    $region19: #{_fused_mlp.1} parent=1 // pred_check_branch
      %22 = sbr.rel (0) target = $region21
    $region20: #{_fused_mlp.1} parent=1 // pred_region
      _
    $region21: #{_fused_mlp.1} parent=1 // pred_fallthru
      _
    // Predicated region
    $region22: #{_fused_mlp.1} parent=1 // pred_check
      _
    $region23: #{_fused_mlp.1} parent=1 // pred_check_branch
      %24 = sbr.rel (0) target = $region25
    $region24: #{_fused_mlp.1} parent=1 // pred_region
      _
    $region25: #{_fused_mlp.1} parent=1 // pred_fallthru
      _
    %v25 = vld [vmem:[%s2] sm:$0xff]
    %v26 = vld [vmem:[%s2 + $0x8] sm:$0xff]
    %v27 = vld [vmem:[%s2 + $0x10] sm:$0xff]
    %v28 = vld [vmem:[%s2 + $0x18] sm:$0xff]
    %v29 = vld [vmem:[%s1] sm:$0xff]
    %v30 = vld [vmem:[%s3] sm:$0x1]
    %v32 = vperm.slane %v30, 0
    %vm34 = vcmask 261120
    %v36 = vsel %vm34, %v29, 0
    %38 = vmatpush.msra.mxu0 0.0
    %39 = vmatpush.msra.mxu0 0.0
    %40 = vmatpush.msra.mxu0 0.0
    %41 = vmatpush.msra.mxu0 0.0
    %42 = vmatpush.msra.mxu0 0.0
    %43 = vmatpush.msra.mxu0 0.0
    %44 = vmatpush.msra.mxu0 0.0
    %45 = vmatpush.msra.mxu0 0.0
    %46 = vmatpush.msra.mxu0 0.0
    %47 = vmatpush.msra.mxu0 0.0
    %48 = vmatpush.msra.mxu0 0.0
    %49 = vmatpush.msra.mxu0 0.0
    %50 = vmatpush.msra.mxu0 %v28
    %51 = vmatpush.msra.mxu0 %v27
    %52 = vmatpush.msra.mxu0 %v26
    %53 = vmatpush.msra.mxu0 %v25
    %54 = vmatmul.f32.gmra.mxu0 %v36
    %v55 = vpop.f32.mrf.mxu0
    %v56 = vadd.f32 %v32, %v55
    %57 = vdwg.mxu0
    %v58 = vmul.f32 %v56, 0.5
    %v59 = vmul.f32 %v56, 0.044715
    %v60 = vmul.f32 %v59, %v56
    %v61 = vmul.f32 %v60, %v56
    %v62 = vadd.f32 %v56, %v61
    %v63 = vmul.f32 %v62, 0.7978846
    %v64 = vtanh.pop %v63
    %v65 = vadd.f32 %v64, 1.0
    %v66 = vmul.f32 %v58, %v65
    %s67 = sld [smem:[#allocation2]]
    %v68 = vstv %s67
    %v69 = vmul.f32 %v66, %v68
    %v70 = vld [vmem:[%s4] sm:$0xff]
    %v71 = vld [vmem:[%s4 + $0x8] sm:$0xff]
    %v72 = vld [vmem:[%s4 + $0x10] sm:$0xff]
    %v73 = vld [vmem:[%s4 + $0x18] sm:$0xff]
    %v74 = vld [vmem:[%s4 + $0x20] sm:$0xff]
    %v75 = vld [vmem:[%s4 + $0x28] sm:$0xff]
    %v76 = vld [vmem:[%s4 + $0x30] sm:$0xff]
    %v77 = vld [vmem:[%s4 + $0x38] sm:$0xff]
    %v78 = vld [vmem:[%s5] sm:$0x1]
    %v80 = vperm.slane %v78, 0
    %vm82 = vcmask 523264
    %v84 = vsel %vm82, %v69, 0
    %86 = vmatpush.msra.mxu0 0.0
    %87 = vmatpush.msra.mxu0 0.0
    %88 = vmatpush.msra.mxu0 0.0
    %89 = vmatpush.msra.mxu0 0.0
    %90 = vmatpush.msra.mxu0 0.0
    %91 = vmatpush.msra.mxu0 0.0
    %92 = vmatpush.msra.mxu0 0.0
    %93 = vmatpush.msra.mxu0 0.0
    %94 = vmatpush.msra.mxu0 %v77
    %95 = vmatpush.msra.mxu0 %v76
    %96 = vmatpush.msra.mxu0 %v75
    %97 = vmatpush.msra.mxu0 %v74
    %98 = vmatpush.msra.mxu0 %v73
    %99 = vmatpush.msra.mxu0 %v72
    %100 = vmatpush.msra.mxu0 %v71
    %101 = vmatpush.msra.mxu0 %v70
    %102 = vmatmul.f32.gmra.mxu0 %v84
    %v103 = vpop.f32.mrf.mxu0
    %v104 = vadd.f32 %v80, %v103
    %105 = vdwg.mxu0
    %106 = vst.msk [vmem:[#allocation3] sm:$0xff] %vm34, %v104
    // Predicated region
    $region26: #{_fused_mlp.1} parent=1 // pred_check
      _
    $region27: #{_fused_mlp.1} parent=1 // pred_check_branch
      %108 = sbr.rel (0) target = $region29
    $region28: #{_fused_mlp.1} parent=1 // pred_region
      %110 = vsyncadd [#allocation4], 0
      %s112 = sshll.u32 [#allocation3], 4
      %s113 = int_to_ptr.vmem [resolvable:$true] %s112
      %s114 = sshll.u32 %s6, 4
      %s115 = int_to_ptr.hbm [resolvable:$true] %s114
      %117 = dma.vmem_to_hbm [thread:$0]  %s113, 128, %s115, [#allocation4]
    $region29: #{_fused_mlp.1} parent=1 // pred_fallthru
      _
    // Predicated region
    $region30: #{_fused_mlp.1} parent=1 // pred_check
      _
    $region31: #{_fused_mlp.1} parent=1 // pred_check_branch
      %119 = sbr.rel (0) target = $region33
    $region32: #{_fused_mlp.1} parent=1 // pred_region
      %121 = dma.done [#allocation4], 128
    $region33: #{_fused_mlp.1} parent=1 // pred_fallthru
      _
    %122 = vsyncpa [#allocation4], 1

</llo_original>
